<compile_context>
chip_gen: v6e
topology: v6e:2x2x1
jax: 0.10.0
libtpu: 0.0.40
codegen_flags: <defaults>
</compile_context>

<pallas_src>
import functools

import jax
import jax.numpy as jnp
from jax.experimental import pallas as pl
from jax.experimental.pallas import tpu as pltpu

_LANE = 128
_SUBLANE = 8
_VMEM_BUDGET_BYTES = 24 * 1024 * 1024  # leave headroom under v7x's 32 MiB scoped default


def _round_up(x, m):
    return ((x + m - 1) // m) * m


def _calculate_block_dims(input_dim, latent_dim, num_blocks):
    """Mirrors Encoder._calculate_block_dims exactly."""
    step = (input_dim - latent_dim) / num_blocks
    return [int(input_dim - i * step) for i in range(num_blocks + 1)] + [latent_dim]


def _encoder_kernel(x_ref, w_ref, b_ref, out_ref, *, num_layers):
    """Fused MLP forward on one batch tile.

    x_ref:   (TILE_B, P)      padded input tile
    w_ref:   (L, P, P)        stacked, zero-padded (in, out) weights (VMEM-resident)
    b_ref:   (L, 1, P)        stacked, zero-padded biases (VMEM-resident)
    out_ref: (TILE_B, P)      lane-dense padded output tile
    """
    h = x_ref[...]
    # num_blocks hidden layers: Linear -> LeakyReLU(0.2)
    for l in range(num_layers - 1):
        y = jnp.dot(h, w_ref[l], preferred_element_type=jnp.float32) + b_ref[l]
        h = jnp.where(y > 0, y, 0.2 * y)
    # final layer: Linear -> Tanh  (tanh goes to the EUP, off the VALU critical path)
    y = (jnp.dot(h, w_ref[num_layers - 1], preferred_element_type=jnp.float32)
         + b_ref[num_layers - 1])
    out_ref[...] = jnp.tanh(y)


def init_encoder_params(key, input_dim, latent_dim, num_blocks=5,
                        dtype=jnp.float32):
    """PyTorch nn.Linear-style init: U(-1/sqrt(fan_in), +1/sqrt(fan_in)).

    Weights are stored pre-transposed to (in, out) so the kernel computes
    y = x @ W + b (== PyTorch's x @ W.T + b).
    """
    block_dims = _calculate_block_dims(input_dim, latent_dim, num_blocks)
    params = []
    for l in range(num_blocks + 1):            # num_blocks blocks + final layer
        in_f, out_f = block_dims[l], block_dims[l + 1]
        key, kw, kb = jax.random.split(key, 3)
        bound = 1.0 / (in_f ** 0.5)
        w = jax.random.uniform(kw, (in_f, out_f), dtype, -bound, bound)
        b = jax.random.uniform(kb, (out_f,), dtype, -bound, bound)
        params.append((w, b))
    return block_dims, params


def pack_encoder_params(params):
    """Zero-pad every layer to a common lane-aligned width P and stack."""
    num_layers = len(params)
    max_dim = max(max(w.shape) for w, _ in params)
    P = _round_up(max_dim, _LANE)
    w_stack = jnp.zeros((num_layers, P, P), jnp.float32)
    b_stack = jnp.zeros((num_layers, 1, P), jnp.float32)
    for l, (w, b) in enumerate(params):
        in_f, out_f = w.shape
        w_stack = w_stack.at[l, :in_f, :out_f].set(w.astype(jnp.float32))
        b_stack = b_stack.at[l, 0, :out_f].set(b.astype(jnp.float32))
    return w_stack, b_stack, P


def _pick_tile_b(requested_tile_b, B, P, num_layers):
    """Largest batch tile that keeps (2x in + 2x out tiles + resident slabs)
    under the VMEM budget; multiple of the sublane count."""
    tile_b = min(requested_tile_b, _round_up(B, _SUBLANE))
    tile_b = max(_SUBLANE, _round_up(tile_b, _SUBLANE))
    resident = 2 * (num_layers * P * P * 4 + num_layers * P * 4)   # weights + biases (2 bufs)
    while tile_b > _SUBLANE:
        tiles = 4 * tile_b * P * 4                                  # 2x in + 2x out buffers
        if resident + tiles <= _VMEM_BUDGET_BYTES:
            break
        tile_b //= 2
        tile_b = max(_SUBLANE, _round_up(tile_b, _SUBLANE))
    return tile_b


def encoder_forward(x, w_stack, b_stack, latent_dim, *, tile_b=1024):
    """x: (B, input_dim) float32 -> latent codes (B, latent_dim) float32."""
    B, in_dim = x.shape
    num_layers, P, _ = w_stack.shape

    tile_b = _pick_tile_b(tile_b, B, P, num_layers)
    b_pad = _round_up(B, tile_b)

    x_pad = jnp.pad(x.astype(jnp.float32), ((0, b_pad - B), (0, P - in_dim)))

    kernel = functools.partial(_encoder_kernel, num_layers=num_layers)

    flops = 2 * b_pad * P * P * num_layers + 3 * b_pad * P * num_layers
    bytes_accessed = (x_pad.size + w_stack.size + b_stack.size + b_pad * P) * 4
    cost = pl.CostEstimate(flops=flops,
                           transcendentals=b_pad * P,
                           bytes_accessed=bytes_accessed)

    out = pl.pallas_call(
        kernel,
        out_shape=jax.ShapeDtypeStruct((b_pad, P), jnp.float32),
        grid=(b_pad // tile_b,),
        in_specs=[
            pl.BlockSpec((tile_b, P), lambda i: (i, 0)),            # x tile
            pl.BlockSpec((num_layers, P, P), lambda i: (0, 0, 0)),  # weights (resident)
            pl.BlockSpec((num_layers, 1, P), lambda i: (0, 0, 0)),  # biases  (resident)
        ],
        out_specs=pl.BlockSpec((tile_b, P), lambda i: (i, 0)),
        compiler_params=pltpu.CompilerParams(
            dimension_semantics=("parallel",),   # split batch tiles across v7x TCs
        ),
        cost_estimate=cost,
    )(x_pad, w_stack, b_stack)

    # Slice away batch padding and lane padding (output stayed lane-dense until here).
    return out[:B, :latent_dim]


def encoder_ref(x, params):
    """Pure-JAX reference (high-precision matmuls) for correctness checking."""
    h = x
    n = len(params)
    for l, (w, b) in enumerate(params):
        h = jnp.dot(h, w, precision=jax.lax.Precision.HIGHEST) + b
        if l < n - 1:
            h = jnp.where(h > 0, h, 0.2 * h)   # LeakyReLU(0.2)
        else:
            h = jnp.tanh(h)
    return h


if __name__ == "__main__":
    key = jax.random.PRNGKey(0)

    input_dim = 64
    latent_dim = 8
    num_blocks = 5
    batch = 16

    block_dims, params = init_encoder_params(key, input_dim, latent_dim,
                                             num_blocks=num_blocks)
    print('Block dimensions:', block_dims)   # mirrors Encoder.__init__ print

    w_stack, b_stack, P = pack_encoder_params(params)

    key, kx = jax.random.split(key)
    x = jax.random.normal(kx, (batch, input_dim), jnp.float32)

    out = encoder_forward(x, w_stack, b_stack, latent_dim)
    out = jax.block_until_ready(out)

    ref = encoder_ref(x, params)
    assert out.shape == (batch, latent_dim), out.shape
    assert jnp.allclose(out, ref, atol=1e-4, rtol=1e-4), (out, ref)

    print("KERNEL_OK")
</pallas_src>

<mosaic_0001>
module attributes {stable_mosaic.version = 11 : i64} {
  func.func @_encoder_kernel(%arg0: i32, %arg1: memref<16x128xf32, #tpu.memory_space<vmem>>, %arg2: memref<6x128x128xf32, #tpu.memory_space<vmem>>, %arg3: memref<6x1x128xf32, #tpu.memory_space<vmem>>, %arg4: memref<16x128xf32, #tpu.memory_space<vmem>>) attributes {dimension_semantics = [#tpu.dimension_semantics<parallel>], iteration_bounds = array<i64: 1>, scalar_prefetch = 0 : i64, scratch_operands = 0 : i64, tpu.core_type = #tpu.core_type<tc>, window_params = [{transform_indices = @transform_0, window_bounds = array<i64: 16, 128>}, {pipeline_mode = #tpu.pipeline_mode<synchronous>, transform_indices = @transform_1, window_bounds = array<i64: 6, 128, 128>}, {pipeline_mode = #tpu.pipeline_mode<synchronous>, transform_indices = @transform_2, window_bounds = array<i64: 6, 1, 128>}, {transform_indices = @transform_3, window_bounds = array<i64: 16, 128>}]} {
    %c0 = arith.constant 0 : index
    %c0_0 = arith.constant 0 : index
    %0 = vector.load %arg1[%c0, %c0_0] : memref<16x128xf32, #tpu.memory_space<vmem>>, vector<16x128xf32>
    %c0_1 = arith.constant 0 : index
    %c0_2 = arith.constant 0 : index
    %c0_3 = arith.constant 0 : index
    %1 = vector.load %arg2[%c0_1, %c0_2, %c0_3] : memref<6x128x128xf32, #tpu.memory_space<vmem>>, vector<1x128x128xf32>
    %2 = vector.shape_cast %1 : vector<1x128x128xf32> to vector<128x128xf32>
    %cst = arith.constant dense<0.000000e+00> : vector<16x128xf32>
    %3 = tpu.matmul %0, %2, %cst {dimension_numbers = #tpu.dot_dimension_numbers<[1], [0], [0], [1], [0, 0, 1, 1], [], []>} : vector<16x128xf32>, vector<128x128xf32>, vector<16x128xf32> -> vector<16x128xf32>
    %c0_4 = arith.constant 0 : index
    %c0_5 = arith.constant 0 : index
    %c0_6 = arith.constant 0 : index
    %4 = vector.load %arg3[%c0_4, %c0_5, %c0_6] : memref<6x1x128xf32, #tpu.memory_space<vmem>>, vector<1x1x128xf32>
    %5 = vector.shape_cast %4 : vector<1x1x128xf32> to vector<1x128xf32>
    %6 = vector.broadcast %5 : vector<1x128xf32> to vector<16x128xf32>
    %7 = arith.addf %3, %6 : vector<16x128xf32>
    %cst_7 = arith.constant 0.000000e+00 : f32
    %8 = vector.broadcast %cst_7 : f32 to vector<16x128xf32>
    %9 = arith.cmpf ogt, %7, %8 : vector<16x128xf32>
    %cst_8 = arith.constant 2.000000e-01 : f32
    %10 = vector.broadcast %cst_8 : f32 to vector<16x128xf32>
    %11 = arith.mulf %10, %7 : vector<16x128xf32>
    %12 = arith.select %9, %7, %11 : vector<16x128xi1>, vector<16x128xf32>
    %c1 = arith.constant 1 : index
    %c0_9 = arith.constant 0 : index
    %c0_10 = arith.constant 0 : index
    %13 = vector.load %arg2[%c1, %c0_9, %c0_10] : memref<6x128x128xf32, #tpu.memory_space<vmem>>, vector<1x128x128xf32>
    %14 = vector.shape_cast %13 : vector<1x128x128xf32> to vector<128x128xf32>
    %cst_11 = arith.constant dense<0.000000e+00> : vector<16x128xf32>
    %15 = tpu.matmul %12, %14, %cst_11 {dimension_numbers = #tpu.dot_dimension_numbers<[1], [0], [0], [1], [0, 0, 1, 1], [], []>} : vector<16x128xf32>, vector<128x128xf32>, vector<16x128xf32> -> vector<16x128xf32>
    %c1_12 = arith.constant 1 : index
    %c0_13 = arith.constant 0 : index
    %c0_14 = arith.constant 0 : index
    %16 = vector.load %arg3[%c1_12, %c0_13, %c0_14] : memref<6x1x128xf32, #tpu.memory_space<vmem>>, vector<1x1x128xf32>
    %17 = vector.shape_cast %16 : vector<1x1x128xf32> to vector<1x128xf32>
    %18 = vector.broadcast %17 : vector<1x128xf32> to vector<16x128xf32>
    %19 = arith.addf %15, %18 : vector<16x128xf32>
    %cst_15 = arith.constant 0.000000e+00 : f32
    %20 = vector.broadcast %cst_15 : f32 to vector<16x128xf32>
    %21 = arith.cmpf ogt, %19, %20 : vector<16x128xf32>
    %cst_16 = arith.constant 2.000000e-01 : f32
    %22 = vector.broadcast %cst_16 : f32 to vector<16x128xf32>
    %23 = arith.mulf %22, %19 : vector<16x128xf32>
    %24 = arith.select %21, %19, %23 : vector<16x128xi1>, vector<16x128xf32>
    %c2 = arith.constant 2 : index
    %c0_17 = arith.constant 0 : index
    %c0_18 = arith.constant 0 : index
    %25 = vector.load %arg2[%c2, %c0_17, %c0_18] : memref<6x128x128xf32, #tpu.memory_space<vmem>>, vector<1x128x128xf32>
    %26 = vector.shape_cast %25 : vector<1x128x128xf32> to vector<128x128xf32>
    %cst_19 = arith.constant dense<0.000000e+00> : vector<16x128xf32>
    %27 = tpu.matmul %24, %26, %cst_19 {dimension_numbers = #tpu.dot_dimension_numbers<[1], [0], [0], [1], [0, 0, 1, 1], [], []>} : vector<16x128xf32>, vector<128x128xf32>, vector<16x128xf32> -> vector<16x128xf32>
    %c2_20 = arith.constant 2 : index
    %c0_21 = arith.constant 0 : index
    %c0_22 = arith.constant 0 : index
    %28 = vector.load %arg3[%c2_20, %c0_21, %c0_22] : memref<6x1x128xf32, #tpu.memory_space<vmem>>, vector<1x1x128xf32>
    %29 = vector.shape_cast %28 : vector<1x1x128xf32> to vector<1x128xf32>
    %30 = vector.broadcast %29 : vector<1x128xf32> to vector<16x128xf32>
    %31 = arith.addf %27, %30 : vector<16x128xf32>
    %cst_23 = arith.constant 0.000000e+00 : f32
    %32 = vector.broadcast %cst_23 : f32 to vector<16x128xf32>
    %33 = arith.cmpf ogt, %31, %32 : vector<16x128xf32>
    %cst_24 = arith.constant 2.000000e-01 : f32
    %34 = vector.broadcast %cst_24 : f32 to vector<16x128xf32>
    %35 = arith.mulf %34, %31 : vector<16x128xf32>
    %36 = arith.select %33, %31, %35 : vector<16x128xi1>, vector<16x128xf32>
    %c3 = arith.constant 3 : index
    %c0_25 = arith.constant 0 : index
    %c0_26 = arith.constant 0 : index
    %37 = vector.load %arg2[%c3, %c0_25, %c0_26] : memref<6x128x128xf32, #tpu.memory_space<vmem>>, vector<1x128x128xf32>
    %38 = vector.shape_cast %37 : vector<1x128x128xf32> to vector<128x128xf32>
    %cst_27 = arith.constant dense<0.000000e+00> : vector<16x128xf32>
    %39 = tpu.matmul %36, %38, %cst_27 {dimension_numbers = #tpu.dot_dimension_numbers<[1], [0], [0], [1], [0, 0, 1, 1], [], []>} : vector<16x128xf32>, vector<128x128xf32>, vector<16x128xf32> -> vector<16x128xf32>
    %c3_28 = arith.constant 3 : index
    %c0_29 = arith.constant 0 : index
    %c0_30 = arith.constant 0 : index
    %40 = vector.load %arg3[%c3_28, %c0_29, %c0_30] : memref<6x1x128xf32, #tpu.memory_space<vmem>>, vector<1x1x128xf32>
    %41 = vector.shape_cast %40 : vector<1x1x128xf32> to vector<1x128xf32>
    %42 = vector.broadcast %41 : vector<1x128xf32> to vector<16x128xf32>
    %43 = arith.addf %39, %42 : vector<16x128xf32>
    %cst_31 = arith.constant 0.000000e+00 : f32
    %44 = vector.broadcast %cst_31 : f32 to vector<16x128xf32>
    %45 = arith.cmpf ogt, %43, %44 : vector<16x128xf32>
    %cst_32 = arith.constant 2.000000e-01 : f32
    %46 = vector.broadcast %cst_32 : f32 to vector<16x128xf32>
    %47 = arith.mulf %46, %43 : vector<16x128xf32>
    %48 = arith.select %45, %43, %47 : vector<16x128xi1>, vector<16x128xf32>
    %c4 = arith.constant 4 : index
    %c0_33 = arith.constant 0 : index
    %c0_34 = arith.constant 0 : index
    %49 = vector.load %arg2[%c4, %c0_33, %c0_34] : memref<6x128x128xf32, #tpu.memory_space<vmem>>, vector<1x128x128xf32>
    %50 = vector.shape_cast %49 : vector<1x128x128xf32> to vector<128x128xf32>
    %cst_35 = arith.constant dense<0.000000e+00> : vector<16x128xf32>
    %51 = tpu.matmul %48, %50, %cst_35 {dimension_numbers = #tpu.dot_dimension_numbers<[1], [0], [0], [1], [0, 0, 1, 1], [], []>} : vector<16x128xf32>, vector<128x128xf32>, vector<16x128xf32> -> vector<16x128xf32>
    %c4_36 = arith.constant 4 : index
    %c0_37 = arith.constant 0 : index
    %c0_38 = arith.constant 0 : index
    %52 = vector.load %arg3[%c4_36, %c0_37, %c0_38] : memref<6x1x128xf32, #tpu.memory_space<vmem>>, vector<1x1x128xf32>
    %53 = vector.shape_cast %52 : vector<1x1x128xf32> to vector<1x128xf32>
    %54 = vector.broadcast %53 : vector<1x128xf32> to vector<16x128xf32>
    %55 = arith.addf %51, %54 : vector<16x128xf32>
    %cst_39 = arith.constant 0.000000e+00 : f32
    %56 = vector.broadcast %cst_39 : f32 to vector<16x128xf32>
    %57 = arith.cmpf ogt, %55, %56 : vector<16x128xf32>
    %cst_40 = arith.constant 2.000000e-01 : f32
    %58 = vector.broadcast %cst_40 : f32 to vector<16x128xf32>
    %59 = arith.mulf %58, %55 : vector<16x128xf32>
    %60 = arith.select %57, %55, %59 : vector<16x128xi1>, vector<16x128xf32>
    %c5 = arith.constant 5 : index
    %c0_41 = arith.constant 0 : index
    %c0_42 = arith.constant 0 : index
    %61 = vector.load %arg2[%c5, %c0_41, %c0_42] : memref<6x128x128xf32, #tpu.memory_space<vmem>>, vector<1x128x128xf32>
    %62 = vector.shape_cast %61 : vector<1x128x128xf32> to vector<128x128xf32>
    %cst_43 = arith.constant dense<0.000000e+00> : vector<16x128xf32>
    %63 = tpu.matmul %60, %62, %cst_43 {dimension_numbers = #tpu.dot_dimension_numbers<[1], [0], [0], [1], [0, 0, 1, 1], [], []>} : vector<16x128xf32>, vector<128x128xf32>, vector<16x128xf32> -> vector<16x128xf32>
    %c5_44 = arith.constant 5 : index
    %c0_45 = arith.constant 0 : index
    %c0_46 = arith.constant 0 : index
    %64 = vector.load %arg3[%c5_44, %c0_45, %c0_46] : memref<6x1x128xf32, #tpu.memory_space<vmem>>, vector<1x1x128xf32>
    %65 = vector.shape_cast %64 : vector<1x1x128xf32> to vector<1x128xf32>
    %66 = vector.broadcast %65 : vector<1x128xf32> to vector<16x128xf32>
    %67 = arith.addf %63, %66 : vector<16x128xf32>
    %68 = math.tanh %67 : vector<16x128xf32>
    %c0_47 = arith.constant 0 : index
    %c0_48 = arith.constant 0 : index
    %69 = vector.load %arg4[%c0_47, %c0_48] : memref<16x128xf32, #tpu.memory_space<vmem>>, vector<16x128xf32>
    tpu.vector_store %arg4[%c0_47, %c0_48], %68 {strides = array<i32>} : memref<16x128xf32, #tpu.memory_space<vmem>>, vector<16x128xf32>,
    return
  }
  func.func @transform_0(%arg0: i32) -> (i32, i32) {
    %c0_i32 = arith.constant 0 : i32
    %c0_i32_0 = arith.constant 0 : i32
    return %arg0, %c0_i32 : i32, i32
  }
  func.func @transform_1(%arg0: i32) -> (i32, i32, i32) {
    %c0_i32 = arith.constant 0 : i32
    %c0_i32_0 = arith.constant 0 : i32
    %c0_i32_1 = arith.constant 0 : i32
    %c0_i32_2 = arith.constant 0 : i32
    return %c0_i32, %c0_i32_0, %c0_i32_1 : i32, i32, i32
  }
  func.func @transform_2(%arg0: i32) -> (i32, i32, i32) {
    %c0_i32 = arith.constant 0 : i32
    %c0_i32_0 = arith.constant 0 : i32
    %c0_i32_1 = arith.constant 0 : i32
    %c0_i32_2 = arith.constant 0 : i32
    return %c0_i32, %c0_i32_0, %c0_i32_1 : i32, i32, i32
  }
  func.func @transform_3(%arg0: i32) -> (i32, i32) {
    %c0_i32 = arith.constant 0 : i32
    %c0_i32_0 = arith.constant 0 : i32
    return %arg0, %c0_i32 : i32, i32
  }
}

</mosaic_0001>

<llo_original>
// kernel: tpu_custom_call.1
$region0: #{tpu_custom_call.1}
  #allocation0 [shape = 'u32[]', space=smem, size = 0x4, offset = 0x4, fixed_abs, tag = 'smem constant byte address 0x4 - core index']
  #allocation1 [shape = 'u32[144,128]{1,0:T(1,128)}', space=vmem, size = 0x12000, scoped, tag = 'internal scratch']
  %s0 = inlined_call_operand.hbm [shape: f32[16,128], index: 0, kind: input, shape index: {}]
  %s1 = inlined_call_operand.hbm [shape: f32[6,128,128], index: 1, kind: input, shape index: {}]
  %s2 = inlined_call_operand.hbm [shape: f32[6,1,128], index: 2, kind: input, shape index: {}]
  %s3 = inlined_call_operand.hbm [shape: f32[16,128], index: 3, kind: output, shape index: {}]
  %s4 = sld [smem:[#allocation0]]
  $region34: #{tpu_custom_call.1} parent=0
    _
  %s6 = ssub.s32 1, %s4
  %s7 = scalar_select 0, %s6, %s4
  $region1: #{tpu_custom_call.1} parent=0
    #allocation2 [shape = 'u8[8192]{0}', space=vmem, size = 0x2000, scoped, tag = 'input window, operand 0, single buffered']
    #allocation3 [shape = 's32[1]{0}', space=sflag, size = 0x4, scoped, tag = 'scoped memory for tpu_custom_call.1']
    #allocation4 [shape = 's32[1]{0}', space=sflag, size = 0x4, scoped, tag = 'scoped memory for tpu_custom_call.1']
    #allocation5 [shape = 'u8[393216]{0}', space=vmem, size = 0x60000, scoped, tag = 'input window, operand 1, single buffered']
    #allocation6 [shape = 's32[1]{0}', space=sflag, size = 0x4, scoped, tag = 'scoped memory for tpu_custom_call.1']
    #allocation7 [shape = 'u8[3072]{0}', space=vmem, size = 0xc00, scoped, tag = 'input window, operand 2, single buffered']
    #allocation8 [shape = 'u8[8192]{0}', space=vmem, size = 0x2000, scoped, tag = 'output window, operand 0, single buffered']
    %8 = vsyncpa [#allocation3], 0
    %9 = vsyncpa [#allocation6], 0
    %10 = vsyncpa [#allocation4], 0
    // Predicated region
    $region2: #{tpu_custom_call.1} parent=1 // pred_check
      _
    $region3: #{tpu_custom_call.1} parent=1 // pred_check_branch
      %12 = sbr.rel (0) target = $region5
    $region4: #{tpu_custom_call.1} parent=1 // pred_region
      %s14 = ssub.s32 256, 256
      %15 = vsyncadd [#allocation3], %s14
      %s16 = sshll.u32 [#allocation2], 4
      %s17 = int_to_ptr.vmem [resolvable:$true] %s16
      %22 = dma.hbm_to_vmem [thread:$0]  %s0, 256, %s17, [#allocation3], 128, 128, 8
    $region5: #{tpu_custom_call.1} parent=1 // pred_fallthru
      _
    // Predicated region
    $region6: #{tpu_custom_call.1} parent=1 // pred_check
      _
    $region7: #{tpu_custom_call.1} parent=1 // pred_check_branch
      %24 = sbr.rel (0) target = $region9
    $region8: #{tpu_custom_call.1} parent=1 // pred_region
      %s26 = ssub.s32 12288, 12288
      %27 = vsyncadd [#allocation6], %s26
      %s28 = sshll.u32 [#allocation5], 4
      %s29 = int_to_ptr.vmem [resolvable:$true] %s28
      %34 = dma.hbm_to_vmem [thread:$0]  %s1, 12288, %s29, [#allocation6], 128, 128, 8
    $region9: #{tpu_custom_call.1} parent=1 // pred_fallthru
      _
    // Predicated region
    $region10: #{tpu_custom_call.1} parent=1 // pred_check
      _
    $region11: #{tpu_custom_call.1} parent=1 // pred_check_branch
      %36 = sbr.rel (0) target = $region13
    $region12: #{tpu_custom_call.1} parent=1 // pred_region
      %s38 = ssub.s32 96, 96
      %39 = vsyncadd [#allocation6], %s38
      %s40 = sshll.u32 [#allocation7], 4
      %s41 = int_to_ptr.vmem [resolvable:$true] %s40
      %46 = dma.hbm_to_vmem [thread:$0]  %s2, 96, %s41, [#allocation6], 16, 16, 1
    $region13: #{tpu_custom_call.1} parent=1 // pred_fallthru
      _
    // Predicated region
    $region14: #{tpu_custom_call.1} parent=1 // pred_check
      _
    $region15: #{tpu_custom_call.1} parent=1 // pred_check_branch
      %48 = sbr.rel (0) target = $region17
    $region16: #{tpu_custom_call.1} parent=1 // pred_region
      %49 = dma.done [#allocation3], 256
    $region17: #{tpu_custom_call.1} parent=1 // pred_fallthru
      _
    // Predicated region
    $region18: #{tpu_custom_call.1} parent=1 // pred_check
      _
    $region19: #{tpu_custom_call.1} parent=1 // pred_check_branch
      %51 = sbr.rel (0) target = $region21
    $region20: #{tpu_custom_call.1} parent=1 // pred_region
      %52 = dma.done [#allocation6], 12288
    $region21: #{tpu_custom_call.1} parent=1 // pred_fallthru
      _
    // Predicated region
    $region22: #{tpu_custom_call.1} parent=1 // pred_check
      _
    $region23: #{tpu_custom_call.1} parent=1 // pred_check_branch
      %54 = sbr.rel (0) target = $region25
    $region24: #{tpu_custom_call.1} parent=1 // pred_region
      %55 = dma.done [#allocation6], 96
    $region25: #{tpu_custom_call.1} parent=1 // pred_fallthru
      _
    %v56 = vld [vmem:[#allocation2] sm:$0xff]
    %v57 = vld [vmem:[#allocation2 + $0x8] sm:$0xff]
    %v58 = vld [vmem:[#allocation5] sm:$0xff]
    %v59 = vld [vmem:[#allocation5 + $0x8] sm:$0xff]
    %v60 = vld [vmem:[#allocation5 + $0x10] sm:$0xff]
    %v61 = vld [vmem:[#allocation5 + $0x18] sm:$0xff]
    %v62 = vld [vmem:[#allocation5 + $0x20] sm:$0xff]
    %v63 = vld [vmem:[#allocation5 + $0x28] sm:$0xff]
    %v64 = vld [vmem:[#allocation5 + $0x30] sm:$0xff]
    %v65 = vld [vmem:[#allocation5 + $0x38] sm:$0xff]
    %v66 = vld [vmem:[#allocation5 + $0x40] sm:$0xff]
    %v67 = vld [vmem:[#allocation5 + $0x48] sm:$0xff]
    %v68 = vld [vmem:[#allocation5 + $0x50] sm:$0xff]
    %v69 = vld [vmem:[#allocation5 + $0x58] sm:$0xff]
    %v70 = vld [vmem:[#allocation5 + $0x60] sm:$0xff]
    %v71 = vld [vmem:[#allocation5 + $0x68] sm:$0xff]
    %v72 = vld [vmem:[#allocation5 + $0x70] sm:$0xff]
    %v73 = vld [vmem:[#allocation5 + $0x78] sm:$0xff]
    %v74 = vld [vmem:[#allocation7] sm:$0x1]
    %v76 = vlaneseq
    %v77 = vshrl.u32 %v76, 7
    %v78 = vsub.s32 0, %v77
    %v79 = vrot.slane %v74, %v78
    %81 = vmatprep.subr.mxu0 0.0
    %82 = vmatpush1.msra.mxu0 %v73
    %83 = vmatprep.subr.mxu0 0.0
    %84 = vmatpush1.msra.mxu0 %v72
    %85 = vmatprep.subr.mxu0 0.0
    %86 = vmatpush1.msra.mxu0 %v71
    %87 = vmatprep.subr.mxu0 0.0
    %88 = vmatpush1.msra.mxu0 %v70
    %89 = vmatprep.subr.mxu0 0.0
    %90 = vmatpush1.msra.mxu0 %v69
    %91 = vmatprep.subr.mxu0 0.0
    %92 = vmatpush1.msra.mxu0 %v68
    %93 = vmatprep.subr.mxu0 0.0
    %94 = vmatpush1.msra.mxu0 %v67
    %95 = vmatprep.subr.mxu0 0.0
    %96 = vmatpush1.msra.mxu0 %v66
    %97 = vmatprep.subr.mxu0 0.0
    %98 = vmatpush1.msra.mxu0 %v65
    %99 = vmatprep.subr.mxu0 0.0
    %100 = vmatpush1.msra.mxu0 %v64
    %101 = vmatprep.subr.mxu0 0.0
    %102 = vmatpush1.msra.mxu0 %v63
    %103 = vmatprep.subr.mxu0 0.0
    %104 = vmatpush1.msra.mxu0 %v62
    %105 = vmatprep.subr.mxu0 0.0
    %106 = vmatpush1.msra.mxu0 %v61
    %107 = vmatprep.subr.mxu0 0.0
    %108 = vmatpush1.msra.mxu0 %v60
    %109 = vmatprep.subr.mxu0 0.0
    %110 = vmatpush1.msra.mxu0 %v59
    %111 = vmatprep.subr.mxu0 0.0
    %112 = vmatpush1.msra.mxu0 %v58
    %113 = vmatprep.subr.mxu0 0.0
    %114 = vmatpush2.msra.mxu0 0.0
    %115 = vmatprep.subr.mxu0 0.0
    %116 = vmatpush2.msra.mxu0 0.0
    %117 = vmatprep.subr.mxu0 0.0
    %118 = vmatpush2.msra.mxu0 0.0
    %119 = vmatprep.subr.mxu0 0.0
    %120 = vmatpush2.msra.mxu0 0.0
    %121 = vmatprep.subr.mxu0 0.0
    %122 = vmatpush2.msra.mxu0 0.0
    %123 = vmatprep.subr.mxu0 0.0
    %124 = vmatpush2.msra.mxu0 0.0
    %125 = vmatprep.subr.mxu0 0.0
    %126 = vmatpush2.msra.mxu0 0.0
    %127 = vmatprep.subr.mxu0 0.0
    %128 = vmatpush2.msra.mxu0 0.0
    %129 = vmatprep.subr.mxu0 0.0
    %130 = vmatpush2.msra.mxu0 0.0
    %131 = vmatprep.subr.mxu0 0.0
    %132 = vmatpush2.msra.mxu0 0.0
    %133 = vmatprep.subr.mxu0 0.0
    %134 = vmatpush2.msra.mxu0 0.0
    %135 = vmatprep.subr.mxu0 0.0
    %136 = vmatpush2.msra.mxu0 0.0
    %137 = vmatprep.subr.mxu0 0.0
    %138 = vmatpush2.msra.mxu0 0.0
    %139 = vmatprep.subr.mxu0 0.0
    %140 = vmatpush2.msra.mxu0 0.0
    %141 = vmatprep.subr.mxu0 0.0
    %142 = vmatpush2.msra.mxu0 0.0
    %143 = vmatprep.subr.mxu0 0.0
    %144 = vmatpush2.msra.mxu0 0.0
    %145 = vmatprep.mubr.f32.mxu0 0.0
    %146 = vmatmul.mubr.f32.gmra.mxu0 %v56
    %v147 = vpop.f32.mrf.mxu0
    %v148 = vadd.f32 %v79, %v147
    %v149 = vpop.f32.mrf.mxu0
    %150 = vmatprep.mubr.f32.mxu0 0.0
    %151 = vmatmul.mubr.f32.gmra.mxu0 %v57
    %v152 = vpop.f32.mrf.mxu0
    %v153 = vadd.f32 %v79, %v152
    %v154 = vpop.f32.mrf.mxu0
    %155 = vdwg.mxu0
    %vm156 = vcmp.gt.f32.partialorder %v148, 0.0
    %vm157 = vcmp.gt.f32.partialorder %v153, 0.0
    %v158 = vmul.f32 %v148, 0.2
    %v159 = vmul.f32 %v153, 0.2
    %v160 = vsel %vm156, %v148, %v158
    %v161 = vsel %vm157, %v153, %v159
    %s162 = scalar_lea.vmem [#allocation5], 128
    %v163 = vld [vmem:[%s162] sm:$0xff]
    %v164 = vld [vmem:[%s162 + $0x8] sm:$0xff]
    %v165 = vld [vmem:[%s162 + $0x10] sm:$0xff]
    %v166 = vld [vmem:[%s162 + $0x18] sm:$0xff]
    %v167 = vld [vmem:[%s162 + $0x20] sm:$0xff]
    %v168 = vld [vmem:[%s162 + $0x28] sm:$0xff]
    %v169 = vld [vmem:[%s162 + $0x30] sm:$0xff]
    %v170 = vld [vmem:[%s162 + $0x38] sm:$0xff]
    %v171 = vld [vmem:[%s162 + $0x40] sm:$0xff]
    %v172 = vld [vmem:[%s162 + $0x48] sm:$0xff]
    %v173 = vld [vmem:[%s162 + $0x50] sm:$0xff]
    %v174 = vld [vmem:[%s162 + $0x58] sm:$0xff]
    %v175 = vld [vmem:[%s162 + $0x60] sm:$0xff]
    %v176 = vld [vmem:[%s162 + $0x68] sm:$0xff]
    %v177 = vld [vmem:[%s162 + $0x70] sm:$0xff]
    %v178 = vld [vmem:[%s162 + $0x78] sm:$0xff]
    %s179 = scalar_lea.vmem [#allocation7], 1
    %v180 = vld [vmem:[%s179] sm:$0x1]
    %v182 = vlaneseq
    %v183 = vshrl.u32 %v182, 7
    %v184 = vsub.s32 0, %v183
    %v185 = vrot.slane %v180, %v184
    %187 = vmatprep.subr.mxu0 0.0
    %188 = vmatpush1.msra.mxu0 %v178
    %189 = vmatprep.subr.mxu0 0.0
    %190 = vmatpush1.msra.mxu0 %v177
    %191 = vmatprep.subr.mxu0 0.0
    %192 = vmatpush1.msra.mxu0 %v176
    %193 = vmatprep.subr.mxu0 0.0
    %194 = vmatpush1.msra.mxu0 %v175
    %195 = vmatprep.subr.mxu0 0.0
    %196 = vmatpush1.msra.mxu0 %v174
    %197 = vmatprep.subr.mxu0 0.0
    %198 = vmatpush1.msra.mxu0 %v173
    %199 = vmatprep.subr.mxu0 0.0
    %200 = vmatpush1.msra.mxu0 %v172
    %201 = vmatprep.subr.mxu0 0.0
    %202 = vmatpush1.msra.mxu0 %v171
    %203 = vmatprep.subr.mxu0 0.0
    %204 = vmatpush1.msra.mxu0 %v170
    %205 = vmatprep.subr.mxu0 0.0
    %206 = vmatpush1.msra.mxu0 %v169
    %207 = vmatprep.subr.mxu0 0.0
    %208 = vmatpush1.msra.mxu0 %v168
    %209 = vmatprep.subr.mxu0 0.0
    %210 = vmatpush1.msra.mxu0 %v167
    %211 = vmatprep.subr.mxu0 0.0
    %212 = vmatpush1.msra.mxu0 %v166
    %213 = vmatprep.subr.mxu0 0.0
    %214 = vmatpush1.msra.mxu0 %v165
    %215 = vmatprep.subr.mxu0 0.0
    %216 = vmatpush1.msra.mxu0 %v164
    %217 = vmatprep.subr.mxu0 0.0
    %218 = vmatpush1.msra.mxu0 %v163
    %219 = vmatprep.subr.mxu0 0.0
    %220 = vmatpush2.msra.mxu0 0.0
    %221 = vmatprep.subr.mxu0 0.0
    %222 = vmatpush2.msra.mxu0 0.0
    %223 = vmatprep.subr.mxu0 0.0
    %224 = vmatpush2.msra.mxu0 0.0
    %225 = vmatprep.subr.mxu0 0.0
    %226 = vmatpush2.msra.mxu0 0.0
    %227 = vmatprep.subr.mxu0 0.0
    %228 = vmatpush2.msra.mxu0 0.0
    %229 = vmatprep.subr.mxu0 0.0
    %230 = vmatpush2.msra.mxu0 0.0
    %231 = vmatprep.subr.mxu0 0.0
    %232 = vmatpush2.msra.mxu0 0.0
    %233 = vmatprep.subr.mxu0 0.0
    %234 = vmatpush2.msra.mxu0 0.0
    %235 = vmatprep.subr.mxu0 0.0
    %236 = vmatpush2.msra.mxu0 0.0
    %237 = vmatprep.subr.mxu0 0.0
    %238 = vmatpush2.msra.mxu0 0.0
    %239 = vmatprep.subr.mxu0 0.0
    %240 = vmatpush2.msra.mxu0 0.0
    %241 = vmatprep.subr.mxu0 0.0
    %242 = vmatpush2.msra.mxu0 0.0
    %243 = vmatprep.subr.mxu0 0.0
    %244 = vmatpush2.msra.mxu0 0.0
    %245 = vmatprep.subr.mxu0 0.0
    %246 = vmatpush2.msra.mxu0 0.0
    %247 = vmatprep.subr.mxu0 0.0
    %248 = vmatpush2.msra.mxu0 0.0
    %249 = vmatprep.subr.mxu0 0.0
    %250 = vmatpush2.msra.mxu0 0.0
    %251 = vmatprep.mubr.f32.mxu0 0.0
    %252 = vmatmul.mubr.f32.gmra.mxu0 %v160
    %v253 = vpop.f32.mrf.mxu0
    %v254 = vadd.f32 %v185, %v253
    %v255 = vpop.f32.mrf.mxu0
    %256 = vmatprep.mubr.f32.mxu0 0.0
    %257 = vmatmul.mubr.f32.gmra.mxu0 %v161
    %v258 = vpop.f32.mrf.mxu0
    %v259 = vadd.f32 %v185, %v258
    %v260 = vpop.f32.mrf.mxu0
    %261 = vdwg.mxu0
    %vm262 = vcmp.gt.f32.partialorder %v254, 0.0
    %vm263 = vcmp.gt.f32.partialorder %v259, 0.0
    %v264 = vmul.f32 %v254, 0.2
    %v265 = vmul.f32 %v259, 0.2
    %v266 = vsel %vm262, %v254, %v264
    %v267 = vsel %vm263, %v259, %v265
    %s268 = scalar_lea.vmem [#allocation5], 256
    %v269 = vld [vmem:[%s268] sm:$0xff]
    %v270 = vld [vmem:[%s268 + $0x8] sm:$0xff]
    %v271 = vld [vmem:[%s268 + $0x10] sm:$0xff]
    %v272 = vld [vmem:[%s268 + $0x18] sm:$0xff]
    %v273 = vld [vmem:[%s268 + $0x20] sm:$0xff]
    %v274 = vld [vmem:[%s268 + $0x28] sm:$0xff]
    %v275 = vld [vmem:[%s268 + $0x30] sm:$0xff]
    %v276 = vld [vmem:[%s268 + $0x38] sm:$0xff]
    %v277 = vld [vmem:[%s268 + $0x40] sm:$0xff]
    %v278 = vld [vmem:[%s268 + $0x48] sm:$0xff]
    %v279 = vld [vmem:[%s268 + $0x50] sm:$0xff]
    %v280 = vld [vmem:[%s268 + $0x58] sm:$0xff]
    %v281 = vld [vmem:[%s268 + $0x60] sm:$0xff]
    %v282 = vld [vmem:[%s268 + $0x68] sm:$0xff]
    %v283 = vld [vmem:[%s268 + $0x70] sm:$0xff]
    %v284 = vld [vmem:[%s268 + $0x78] sm:$0xff]
    %s285 = scalar_lea.vmem [#allocation7], 2
    %v286 = vld [vmem:[%s285] sm:$0x1]
    %v288 = vlaneseq
    %v289 = vshrl.u32 %v288, 7
    %v290 = vsub.s32 0, %v289
    %v291 = vrot.slane %v286, %v290
    %293 = vmatprep.subr.mxu0 0.0
    %294 = vmatpush1.msra.mxu0 %v284
    %295 = vmatprep.subr.mxu0 0.0
    %296 = vmatpush1.msra.mxu0 %v283
    %297 = vmatprep.subr.mxu0 0.0
    %298 = vmatpush1.msra.mxu0 %v282
    %299 = vmatprep.subr.mxu0 0.0
    %300 = vmatpush1.msra.mxu0 %v281
    %301 = vmatprep.subr.mxu0 0.0
    %302 = vmatpush1.msra.mxu0 %v280
    %303 = vmatprep.subr.mxu0 0.0
    %304 = vmatpush1.msra.mxu0 %v279
    %305 = vmatprep.subr.mxu0 0.0
    %306 = vmatpush1.msra.mxu0 %v278
    %307 = vmatprep.subr.mxu0 0.0
    %308 = vmatpush1.msra.mxu0 %v277
    %309 = vmatprep.subr.mxu0 0.0
    %310 = vmatpush1.msra.mxu0 %v276
    %311 = vmatprep.subr.mxu0 0.0
    %312 = vmatpush1.msra.mxu0 %v275
    %313 = vmatprep.subr.mxu0 0.0
    %314 = vmatpush1.msra.mxu0 %v274
    %315 = vmatprep.subr.mxu0 0.0
    %316 = vmatpush1.msra.mxu0 %v273
    %317 = vmatprep.subr.mxu0 0.0
    %318 = vmatpush1.msra.mxu0 %v272
    %319 = vmatprep.subr.mxu0 0.0
    %320 = vmatpush1.msra.mxu0 %v271
    %321 = vmatprep.subr.mxu0 0.0
    %322 = vmatpush1.msra.mxu0 %v270
    %323 = vmatprep.subr.mxu0 0.0
    %324 = vmatpush1.msra.mxu0 %v269
    %325 = vmatprep.subr.mxu0 0.0
    %326 = vmatpush2.msra.mxu0 0.0
    %327 = vmatprep.subr.mxu0 0.0
    %328 = vmatpush2.msra.mxu0 0.0
    %329 = vmatprep.subr.mxu0 0.0
    %330 = vmatpush2.msra.mxu0 0.0
    %331 = vmatprep.subr.mxu0 0.0
    %332 = vmatpush2.msra.mxu0 0.0
    %333 = vmatprep.subr.mxu0 0.0
    %334 = vmatpush2.msra.mxu0 0.0
    %335 = vmatprep.subr.mxu0 0.0
    %336 = vmatpush2.msra.mxu0 0.0
    %337 = vmatprep.subr.mxu0 0.0
    %338 = vmatpush2.msra.mxu0 0.0
    %339 = vmatprep.subr.mxu0 0.0
    %340 = vmatpush2.msra.mxu0 0.0
    %341 = vmatprep.subr.mxu0 0.0
    %342 = vmatpush2.msra.mxu0 0.0
    %343 = vmatprep.subr.mxu0 0.0
    %344 = vmatpush2.msra.mxu0 0.0
    %345 = vmatprep.subr.mxu0 0.0
    %346 = vmatpush2.msra.mxu0 0.0
    %347 = vmatprep.subr.mxu0 0.0
    %348 = vmatpush2.msra.mxu0 0.0
    %349 = vmatprep.subr.mxu0 0.0
    %350 = vmatpush2.msra.mxu0 0.0
    %351 = vmatprep.subr.mxu0 0.0
    %352 = vmatpush2.msra.mxu0 0.0
    %353 = vmatprep.subr.mxu0 0.0
    %354 = vmatpush2.msra.mxu0 0.0
    %355 = vmatprep.subr.mxu0 0.0
    %356 = vmatpush2.msra.mxu0 0.0
    %357 = vmatprep.mubr.f32.mxu0 0.0
    %358 = vmatmul.mubr.f32.gmra.mxu0 %v266
    %v359 = vpop.f32.mrf.mxu0
    %v360 = vadd.f32 %v291, %v359
    %v361 = vpop.f32.mrf.mxu0
    %362 = vmatprep.mubr.f32.mxu0 0.0
    %363 = vmatmul.mubr.f32.gmra.mxu0 %v267
    %v364 = vpop.f32.mrf.mxu0
    %v365 = vadd.f32 %v291, %v364
    %v366 = vpop.f32.mrf.mxu0
    %367 = vdwg.mxu0
    %vm368 = vcmp.gt.f32.partialorder %v360, 0.0
    %vm369 = vcmp.gt.f32.partialorder %v365, 0.0
    %v370 = vmul.f32 %v360, 0.2
    %v371 = vmul.f32 %v365, 0.2
    %v372 = vsel %vm368, %v360, %v370
    %v373 = vsel %vm369, %v365, %v371
    %s374 = scalar_lea.vmem [#allocation5], 384
    %v375 = vld [vmem:[%s374] sm:$0xff]
    %v376 = vld [vmem:[%s374 + $0x8] sm:$0xff]
    %v377 = vld [vmem:[%s374 + $0x10] sm:$0xff]
    %v378 = vld [vmem:[%s374 + $0x18] sm:$0xff]
    %v379 = vld [vmem:[%s374 + $0x20] sm:$0xff]
    %v380 = vld [vmem:[%s374 + $0x28] sm:$0xff]
    %v381 = vld [vmem:[%s374 + $0x30] sm:$0xff]
    %v382 = vld [vmem:[%s374 + $0x38] sm:$0xff]
    %v383 = vld [vmem:[%s374 + $0x40] sm:$0xff]
    %v384 = vld [vmem:[%s374 + $0x48] sm:$0xff]
    %v385 = vld [vmem:[%s374 + $0x50] sm:$0xff]
    %v386 = vld [vmem:[%s374 + $0x58] sm:$0xff]
    %v387 = vld [vmem:[%s374 + $0x60] sm:$0xff]
    %v388 = vld [vmem:[%s374 + $0x68] sm:$0xff]
    %v389 = vld [vmem:[%s374 + $0x70] sm:$0xff]
    %v390 = vld [vmem:[%s374 + $0x78] sm:$0xff]
    %s391 = scalar_lea.vmem [#allocation7], 3
    %v392 = vld [vmem:[%s391] sm:$0x1]
    %v394 = vlaneseq
    %v395 = vshrl.u32 %v394, 7
    %v396 = vsub.s32 0, %v395
    %v397 = vrot.slane %v392, %v396
    %399 = vmatprep.subr.mxu0 0.0
    %400 = vmatpush1.msra.mxu0 %v390
    %401 = vmatprep.subr.mxu0 0.0
    %402 = vmatpush1.msra.mxu0 %v389
    %403 = vmatprep.subr.mxu0 0.0
    %404 = vmatpush1.msra.mxu0 %v388
    %405 = vmatprep.subr.mxu0 0.0
    %406 = vmatpush1.msra.mxu0 %v387
    %407 = vmatprep.subr.mxu0 0.0
    %408 = vmatpush1.msra.mxu0 %v386
    %409 = vmatprep.subr.mxu0 0.0
    %410 = vmatpush1.msra.mxu0 %v385
    %411 = vmatprep.subr.mxu0 0.0
    %412 = vmatpush1.msra.mxu0 %v384
    %413 = vmatprep.subr.mxu0 0.0
    %414 = vmatpush1.msra.mxu0 %v383
    %415 = vmatprep.subr.mxu0 0.0
    %416 = vmatpush1.msra.mxu0 %v382
    %417 = vmatprep.subr.mxu0 0.0
    %418 = vmatpush1.msra.mxu0 %v381
    %419 = vmatprep.subr.mxu0 0.0
    %420 = vmatpush1.msra.mxu0 %v380
    %421 = vmatprep.subr.mxu0 0.0
    %422 = vmatpush1.msra.mxu0 %v379
    %423 = vmatprep.subr.mxu0 0.0
    %424 = vmatpush1.msra.mxu0 %v378
    %425 = vmatprep.subr.mxu0 0.0
    %426 = vmatpush1.msra.mxu0 %v377
    %427 = vmatprep.subr.mxu0 0.0
    %428 = vmatpush1.msra.mxu0 %v376
    %429 = vmatprep.subr.mxu0 0.0
    %430 = vmatpush1.msra.mxu0 %v375
    %431 = vmatprep.subr.mxu0 0.0
    %432 = vmatpush2.msra.mxu0 0.0
    %433 = vmatprep.subr.mxu0 0.0
    %434 = vmatpush2.msra.mxu0 0.0
    %435 = vmatprep.subr.mxu0 0.0
    %436 = vmatpush2.msra.mxu0 0.0
    %437 = vmatprep.subr.mxu0 0.0
    %438 = vmatpush2.msra.mxu0 0.0
    %439 = vmatprep.subr.mxu0 0.0
    %440 = vmatpush2.msra.mxu0 0.0
    %441 = vmatprep.subr.mxu0 0.0
    %442 = vmatpush2.msra.mxu0 0.0
    %443 = vmatprep.subr.mxu0 0.0
    %444 = vmatpush2.msra.mxu0 0.0
    %445 = vmatprep.subr.mxu0 0.0
    %446 = vmatpush2.msra.mxu0 0.0
    %447 = vmatprep.subr.mxu0 0.0
    %448 = vmatpush2.msra.mxu0 0.0
    %449 = vmatprep.subr.mxu0 0.0
    %450 = vmatpush2.msra.mxu0 0.0
    %451 = vmatprep.subr.mxu0 0.0
    %452 = vmatpush2.msra.mxu0 0.0
    %453 = vmatprep.subr.mxu0 0.0
    %454 = vmatpush2.msra.mxu0 0.0
    %455 = vmatprep.subr.mxu0 0.0
    %456 = vmatpush2.msra.mxu0 0.0
    %457 = vmatprep.subr.mxu0 0.0
    %458 = vmatpush2.msra.mxu0 0.0
    %459 = vmatprep.subr.mxu0 0.0
    %460 = vmatpush2.msra.mxu0 0.0
    %461 = vmatprep.subr.mxu0 0.0
    %462 = vmatpush2.msra.mxu0 0.0
    %463 = vmatprep.mubr.f32.mxu0 0.0
    %464 = vmatmul.mubr.f32.gmra.mxu0 %v372
    %v465 = vpop.f32.mrf.mxu0
    %v466 = vadd.f32 %v397, %v465
    %v467 = vpop.f32.mrf.mxu0
    %468 = vmatprep.mubr.f32.mxu0 0.0
    %469 = vmatmul.mubr.f32.gmra.mxu0 %v373
    %v470 = vpop.f32.mrf.mxu0
    %v471 = vadd.f32 %v397, %v470
    %v472 = vpop.f32.mrf.mxu0
    %473 = vdwg.mxu0
    %vm474 = vcmp.gt.f32.partialorder %v466, 0.0
    %vm475 = vcmp.gt.f32.partialorder %v471, 0.0
    %v476 = vmul.f32 %v466, 0.2
    %v477 = vmul.f32 %v471, 0.2
    %v478 = vsel %vm474, %v466, %v476
    %v479 = vsel %vm475, %v471, %v477
    %s480 = scalar_lea.vmem [#allocation5], 512
    %v481 = vld [vmem:[%s480] sm:$0xff]
    %v482 = vld [vmem:[%s480 + $0x8] sm:$0xff]
    %v483 = vld [vmem:[%s480 + $0x10] sm:$0xff]
    %v484 = vld [vmem:[%s480 + $0x18] sm:$0xff]
    %v485 = vld [vmem:[%s480 + $0x20] sm:$0xff]
    %v486 = vld [vmem:[%s480 + $0x28] sm:$0xff]
    %v487 = vld [vmem:[%s480 + $0x30] sm:$0xff]
    %v488 = vld [vmem:[%s480 + $0x38] sm:$0xff]
    %v489 = vld [vmem:[%s480 + $0x40] sm:$0xff]
    %v490 = vld [vmem:[%s480 + $0x48] sm:$0xff]
    %v491 = vld [vmem:[%s480 + $0x50] sm:$0xff]
    %v492 = vld [vmem:[%s480 + $0x58] sm:$0xff]
    %v493 = vld [vmem:[%s480 + $0x60] sm:$0xff]
    %v494 = vld [vmem:[%s480 + $0x68] sm:$0xff]
    %v495 = vld [vmem:[%s480 + $0x70] sm:$0xff]
    %v496 = vld [vmem:[%s480 + $0x78] sm:$0xff]
    %s497 = scalar_lea.vmem [#allocation7], 4
    %v498 = vld [vmem:[%s497] sm:$0x1]
    %v500 = vlaneseq
    %v501 = vshrl.u32 %v500, 7
    %v502 = vsub.s32 0, %v501
    %v503 = vrot.slane %v498, %v502
    %505 = vmatprep.subr.mxu0 0.0
    %506 = vmatpush1.msra.mxu0 %v496
    %507 = vmatprep.subr.mxu0 0.0
    %508 = vmatpush1.msra.mxu0 %v495
    %509 = vmatprep.subr.mxu0 0.0
    %510 = vmatpush1.msra.mxu0 %v494
    %511 = vmatprep.subr.mxu0 0.0
    %512 = vmatpush1.msra.mxu0 %v493
    %513 = vmatprep.subr.mxu0 0.0
    %514 = vmatpush1.msra.mxu0 %v492
    %515 = vmatprep.subr.mxu0 0.0
    %516 = vmatpush1.msra.mxu0 %v491
    %517 = vmatprep.subr.mxu0 0.0
    %518 = vmatpush1.msra.mxu0 %v490
    %519 = vmatprep.subr.mxu0 0.0
    %520 = vmatpush1.msra.mxu0 %v489
    %521 = vmatprep.subr.mxu0 0.0
    %522 = vmatpush1.msra.mxu0 %v488
    %523 = vmatprep.subr.mxu0 0.0
    %524 = vmatpush1.msra.mxu0 %v487
    %525 = vmatprep.subr.mxu0 0.0
    %526 = vmatpush1.msra.mxu0 %v486
    %527 = vmatprep.subr.mxu0 0.0
    %528 = vmatpush1.msra.mxu0 %v485
    %529 = vmatprep.subr.mxu0 0.0
    %530 = vmatpush1.msra.mxu0 %v484
    %531 = vmatprep.subr.mxu0 0.0
    %532 = vmatpush1.msra.mxu0 %v483
    %533 = vmatprep.subr.mxu0 0.0
    %534 = vmatpush1.msra.mxu0 %v482
    %535 = vmatprep.subr.mxu0 0.0
    %536 = vmatpush1.msra.mxu0 %v481
    %537 = vmatprep.subr.mxu0 0.0
    %538 = vmatpush2.msra.mxu0 0.0
    %539 = vmatprep.subr.mxu0 0.0
    %540 = vmatpush2.msra.mxu0 0.0
    %541 = vmatprep.subr.mxu0 0.0
    %542 = vmatpush2.msra.mxu0 0.0
    %543 = vmatprep.subr.mxu0 0.0
    %544 = vmatpush2.msra.mxu0 0.0
    %545 = vmatprep.subr.mxu0 0.0
    %546 = vmatpush2.msra.mxu0 0.0
    %547 = vmatprep.subr.mxu0 0.0
    %548 = vmatpush2.msra.mxu0 0.0
    %549 = vmatprep.subr.mxu0 0.0
    %550 = vmatpush2.msra.mxu0 0.0
    %551 = vmatprep.subr.mxu0 0.0
    %552 = vmatpush2.msra.mxu0 0.0
    %553 = vmatprep.subr.mxu0 0.0
    %554 = vmatpush2.msra.mxu0 0.0
    %555 = vmatprep.subr.mxu0 0.0
    %556 = vmatpush2.msra.mxu0 0.0
    %557 = vmatprep.subr.mxu0 0.0
    %558 = vmatpush2.msra.mxu0 0.0
    %559 = vmatprep.subr.mxu0 0.0
    %560 = vmatpush2.msra.mxu0 0.0
    %561 = vmatprep.subr.mxu0 0.0
    %562 = vmatpush2.msra.mxu0 0.0
    %563 = vmatprep.subr.mxu0 0.0
    %564 = vmatpush2.msra.mxu0 0.0
    %565 = vmatprep.subr.mxu0 0.0
    %566 = vmatpush2.msra.mxu0 0.0
    %567 = vmatprep.subr.mxu0 0.0
    %568 = vmatpush2.msra.mxu0 0.0
    %569 = vmatprep.mubr.f32.mxu0 0.0
    %570 = vmatmul.mubr.f32.gmra.mxu0 %v478
    %v571 = vpop.f32.mrf.mxu0
    %v572 = vadd.f32 %v503, %v571
    %v573 = vpop.f32.mrf.mxu0
    %574 = vmatprep.mubr.f32.mxu0 0.0
    %575 = vmatmul.mubr.f32.gmra.mxu0 %v479
    %v576 = vpop.f32.mrf.mxu0
    %v577 = vadd.f32 %v503, %v576
    %v578 = vpop.f32.mrf.mxu0
    %579 = vdwg.mxu0
    %vm580 = vcmp.gt.f32.partialorder %v572, 0.0
    %vm581 = vcmp.gt.f32.partialorder %v577, 0.0
    %v582 = vmul.f32 %v572, 0.2
    %v583 = vmul.f32 %v577, 0.2
    %v584 = vsel %vm580, %v572, %v582
    %v585 = vsel %vm581, %v577, %v583
    %s586 = scalar_lea.vmem [#allocation5], 640
    %v587 = vld [vmem:[%s586] sm:$0xff]
    %v588 = vld [vmem:[%s586 + $0x8] sm:$0xff]
    %v589 = vld [vmem:[%s586 + $0x10] sm:$0xff]
    %v590 = vld [vmem:[%s586 + $0x18] sm:$0xff]
    %v591 = vld [vmem:[%s586 + $0x20] sm:$0xff]
    %v592 = vld [vmem:[%s586 + $0x28] sm:$0xff]
    %v593 = vld [vmem:[%s586 + $0x30] sm:$0xff]
    %v594 = vld [vmem:[%s586 + $0x38] sm:$0xff]
    %v595 = vld [vmem:[%s586 + $0x40] sm:$0xff]
    %v596 = vld [vmem:[%s586 + $0x48] sm:$0xff]
    %v597 = vld [vmem:[%s586 + $0x50] sm:$0xff]
    %v598 = vld [vmem:[%s586 + $0x58] sm:$0xff]
    %v599 = vld [vmem:[%s586 + $0x60] sm:$0xff]
    %v600 = vld [vmem:[%s586 + $0x68] sm:$0xff]
    %v601 = vld [vmem:[%s586 + $0x70] sm:$0xff]
    %v602 = vld [vmem:[%s586 + $0x78] sm:$0xff]
    %s603 = scalar_lea.vmem [#allocation7], 5
    %v604 = vld [vmem:[%s603] sm:$0x1]
    %v606 = vlaneseq
    %v607 = vshrl.u32 %v606, 7
    %v608 = vsub.s32 0, %v607
    %v609 = vrot.slane %v604, %v608
    %611 = vmatprep.subr.mxu0 0.0
    %612 = vmatpush1.msra.mxu0 %v602
    %613 = vmatprep.subr.mxu0 0.0
    %614 = vmatpush1.msra.mxu0 %v601
    %615 = vmatprep.subr.mxu0 0.0
    %616 = vmatpush1.msra.mxu0 %v600
    %617 = vmatprep.subr.mxu0 0.0
    %618 = vmatpush1.msra.mxu0 %v599
    %619 = vmatprep.subr.mxu0 0.0
    %620 = vmatpush1.msra.mxu0 %v598
    %621 = vmatprep.subr.mxu0 0.0
    %622 = vmatpush1.msra.mxu0 %v597
    %623 = vmatprep.subr.mxu0 0.0
    %624 = vmatpush1.msra.mxu0 %v596
    %625 = vmatprep.subr.mxu0 0.0
    %626 = vmatpush1.msra.mxu0 %v595
    %627 = vmatprep.subr.mxu0 0.0
    %628 = vmatpush1.msra.mxu0 %v594
    %629 = vmatprep.subr.mxu0 0.0
    %630 = vmatpush1.msra.mxu0 %v593
    %631 = vmatprep.subr.mxu0 0.0
    %632 = vmatpush1.msra.mxu0 %v592
    %633 = vmatprep.subr.mxu0 0.0
    %634 = vmatpush1.msra.mxu0 %v591
    %635 = vmatprep.subr.mxu0 0.0
    %636 = vmatpush1.msra.mxu0 %v590
    %637 = vmatprep.subr.mxu0 0.0
    %638 = vmatpush1.msra.mxu0 %v589
    %639 = vmatprep.subr.mxu0 0.0
    %640 = vmatpush1.msra.mxu0 %v588
    %641 = vmatprep.subr.mxu0 0.0
    %642 = vmatpush1.msra.mxu0 %v587
    %643 = vmatprep.subr.mxu0 0.0
    %644 = vmatpush2.msra.mxu0 0.0
    %645 = vmatprep.subr.mxu0 0.0
    %646 = vmatpush2.msra.mxu0 0.0
    %647 = vmatprep.subr.mxu0 0.0
    %648 = vmatpush2.msra.mxu0 0.0
    %649 = vmatprep.subr.mxu0 0.0
    %650 = vmatpush2.msra.mxu0 0.0
    %651 = vmatprep.subr.mxu0 0.0
    %652 = vmatpush2.msra.mxu0 0.0
    %653 = vmatprep.subr.mxu0 0.0
    %654 = vmatpush2.msra.mxu0 0.0
    %655 = vmatprep.subr.mxu0 0.0
    %656 = vmatpush2.msra.mxu0 0.0
    %657 = vmatprep.subr.mxu0 0.0
    %658 = vmatpush2.msra.mxu0 0.0
    %659 = vmatprep.subr.mxu0 0.0
    %660 = vmatpush2.msra.mxu0 0.0
    %661 = vmatprep.subr.mxu0 0.0
    %662 = vmatpush2.msra.mxu0 0.0
    %663 = vmatprep.subr.mxu0 0.0
    %664 = vmatpush2.msra.mxu0 0.0
    %665 = vmatprep.subr.mxu0 0.0
    %666 = vmatpush2.msra.mxu0 0.0
    %667 = vmatprep.subr.mxu0 0.0
    %668 = vmatpush2.msra.mxu0 0.0
    %669 = vmatprep.subr.mxu0 0.0
    %670 = vmatpush2.msra.mxu0 0.0
    %671 = vmatprep.subr.mxu0 0.0
    %672 = vmatpush2.msra.mxu0 0.0
    %673 = vmatprep.subr.mxu0 0.0
    %674 = vmatpush2.msra.mxu0 0.0
    %675 = vmatprep.mubr.f32.mxu0 0.0
    %676 = vmatmul.mubr.f32.gmra.mxu0 %v584
    %v677 = vpop.f32.mrf.mxu0
    %v678 = vadd.f32 %v609, %v677
    %v679 = vpop.f32.mrf.mxu0
    %680 = vmatprep.mubr.f32.mxu0 0.0
    %681 = vmatmul.mubr.f32.gmra.mxu0 %v585
    %v682 = vpop.f32.mrf.mxu0
    %v683 = vadd.f32 %v609, %v682
    %v684 = vpop.f32.mrf.mxu0
    %685 = vdwg.mxu0
    %v686 = vtanh.pop %v678
    %v687 = vtanh.pop %v683
    %688 = vst [vmem:[#allocation8] sm:$0xff] %v686
    %689 = vst [vmem:[#allocation8 + $0x8] sm:$0xff] %v687
    // Predicated region
    $region26: #{tpu_custom_call.1} parent=1 // pred_check
      _
    $region27: #{tpu_custom_call.1} parent=1 // pred_check_branch
      %691 = sbr.rel (0) target = $region29
    $region28: #{tpu_custom_call.1} parent=1 // pred_region
      %s693 = ssub.s32 256, 256
      %694 = vsyncadd [#allocation4], %s693
      %s695 = sshll.u32 [#allocation8], 4
      %s696 = int_to_ptr.vmem [resolvable:$true] %s695
      %701 = dma.vmem_to_hbm [thread:$0]  %s696, 256, %s3, [#allocation4], 128, 128, 8
    $region29: #{tpu_custom_call.1} parent=1 // pred_fallthru
      _
    // Predicated region
    $region30: #{tpu_custom_call.1} parent=1 // pred_check
      _
    $region31: #{tpu_custom_call.1} parent=1 // pred_check_branch
      %703 = sbr.rel (0) target = $region33
    $region32: #{tpu_custom_call.1} parent=1 // pred_region
      %704 = dma.done [#allocation4], 256
    $region33: #{tpu_custom_call.1} parent=1 // pred_fallthru
      _
    %705 = vsyncpa [#allocation3], 1
    %706 = vsyncpa [#allocation6], 1
    %707 = vsyncpa [#allocation4], 1

</llo_original>
